<compile_context>
chip_gen: v6e
topology: v6e:2x2x1
jax: 0.10.0
libtpu: 0.0.40
codegen_flags: <defaults>
</compile_context>

<pallas_src>
import functools

import jax
import jax.numpy as jnp
from jax.experimental import pallas as pl
from jax.experimental.pallas import tpu as pltpu


_VMEM_LIMIT_BYTES = 48 * 1024 * 1024   # explicit scoped-VMEM limit (safe on v5e/v6e/v7x)
_TILE_BUDGET_BYTES = 24 * 1024 * 1024  # budget for the double-buffered streamed x tiles


def _round_up(n: int, m: int) -> int:
    return ((n + m - 1) // m) * m


def _cdiv(a: int, b: int) -> int:
    return (a + b - 1) // b


def _choose_tb(batch: int, block_b: int) -> int:
    """Batch tile: multiple of 8; >=2 tiles when B is large (v7x megacore)."""
    b_al = _round_up(batch, 8)
    if b_al <= 256:
        return b_al
    half = _round_up(_cdiv(b_al, 2), 128)
    return max(128, min(half, _round_up(block_b, 128)))


# ---------------------------------------------------------------------------
# Kernels
# ---------------------------------------------------------------------------
def _gemv_fullk_kernel(x_ref, w_ref, b_ref, o_ref):
    # x_ref: (tb, D)   w_ref: (D, 1) resident   b_ref: (1,) SMEM   o_ref: (tb, 1)
    acc = jnp.dot(x_ref[...], w_ref[...], preferred_element_type=jnp.float32)
    # torch.round rounds half-to-even; jnp.round matches.
    o_ref[...] = jnp.round(acc + b_ref[0]).astype(o_ref.dtype)


def _gemv_ktiled_kernel(x_ref, w_ref, b_ref, o_ref, acc_ref, *, tk, d_total, ragged):
    # x_ref: (tb, tk)   w_ref: (d_pad, 1) VMEM-resident   acc_ref: (tb, 1) f32 scratch
    k = pl.program_id(1)

    @pl.when(k == 0)
    def _init():
        acc_ref[...] = jnp.zeros_like(acc_ref)

    xb = x_ref[...]
    if ragged:
        # Last K tile extends past D: zero the garbage tail lanes (VPU has huge slack).
        col = jax.lax.broadcasted_iota(jnp.int32, xb.shape, 1) + k * tk
        xb = jnp.where(col < d_total, xb, jnp.zeros_like(xb))

    k_off = pl.multiple_of(k * tk, 128)
    acc_ref[...] += jnp.dot(xb, w_ref[pl.ds(k_off, tk), :],
                            preferred_element_type=jnp.float32)

    @pl.when(k == pl.num_programs(1) - 1)
    def _finalize():
        o_ref[...] = jnp.round(acc_ref[...] + b_ref[0]).astype(o_ref.dtype)


# ---------------------------------------------------------------------------
# Wrapper
# ---------------------------------------------------------------------------
@functools.partial(jax.jit, static_argnames=("block_b", "block_k"))
def integer_regression_forward(x, weight, bias, *, block_b=512, block_k=2048):
    """x: (B, D), weight: (1, D) or (D,), bias: (1,) -> (B, 1) f32 == round(x @ w.T + b)."""
    B, D = x.shape
    if not jnp.issubdtype(x.dtype, jnp.floating):
        x = x.astype(jnp.float32)
    dtype = x.dtype                         # stream x as-is (bf16 stays bf16, f32 stays f32)
    itemsize = jnp.dtype(dtype).itemsize

    # Stationary operand as a (D, 1) column -> standard (M,K)x(K,N) MXU form: no
    # transpose/relayout of the streamed x tile is ever needed.  Integer weights are
    # exact in bf16 as well as f32.
    w_col = jnp.asarray(weight, dtype).reshape(D, 1)
    b = jnp.asarray(bias, jnp.float32).reshape(1)

    tb = _choose_tb(B, block_b)
    d_lanes = _round_up(D, 128)
    use_full_k = (D <= block_k) and (2 * tb * d_lanes * itemsize <= _TILE_BUDGET_BYTES)

    out_shape = jax.ShapeDtypeStruct((B, 1), jnp.float32)
    smem_spec = pl.BlockSpec(memory_space=pltpu.MemorySpace.SMEM)

    if use_full_k:
        # ------- fast path: no K grid axis, single dot per batch tile -------
        nb = _cdiv(B, tb)
        return pl.pallas_call(
            _gemv_fullk_kernel,
            out_shape=out_shape,
            grid_spec=pltpu.PrefetchScalarGridSpec(
                num_scalar_prefetch=0,
                grid=(nb,),
                in_specs=[
                    pl.BlockSpec((tb, D), lambda i: (i, 0)),   # streamed x slab (full K)
                    pl.BlockSpec((D, 1), lambda i: (0, 0)),    # VMEM-resident weight
                    smem_spec,                                 # bias scalar in SMEM
                ],
                out_specs=pl.BlockSpec((tb, 1), lambda i: (i, 0)),
            ),
            compiler_params=pltpu.CompilerParams(
                dimension_semantics=("parallel",),
                vmem_limit_bytes=_VMEM_LIMIT_BYTES,
            ),
            cost_estimate=pl.CostEstimate(
                flops=2 * B * D,
                transcendentals=0,
                bytes_accessed=itemsize * (B * D + D) + 4 * B,
            ),
        )(x, w_col, b)

    # ------- K-tiled path: only for very large D -------
    tk = max(128, _round_up(min(block_k, D), 128))
    while 2 * tb * tk * itemsize > _TILE_BUDGET_BYTES and tk > 128:
        tk = max(128, _round_up(tk // 2, 128))
    while 2 * tb * tk * itemsize > _TILE_BUDGET_BYTES and tb > 128:
        tb = max(128, _round_up(tb // 2, 8))

    nb = _cdiv(B, tb)
    nk = _cdiv(D, tk)
    d_pad = nk * tk
    if d_pad != D:
        w_col = jnp.pad(w_col, ((0, d_pad - D), (0, 0)))   # only the tiny weight is padded

    kernel = functools.partial(
        _gemv_ktiled_kernel, tk=tk, d_total=D, ragged=(d_pad != D))

    return pl.pallas_call(
        kernel,
        out_shape=out_shape,
        grid_spec=pltpu.PrefetchScalarGridSpec(
            num_scalar_prefetch=0,
            grid=(nb, nk),                                       # reduction axis last
            in_specs=[
                pl.BlockSpec((tb, tk), lambda i, k: (i, k)),      # streamed x tiles
                pl.BlockSpec((d_pad, 1), lambda i, k: (0, 0)),    # resident weight, one DMA
                smem_spec,                                        # bias scalar in SMEM
            ],
            out_specs=pl.BlockSpec((tb, 1), lambda i, k: (i, 0)),
            scratch_shapes=[pltpu.VMEM((tb, 1), jnp.float32)],
        ),
        compiler_params=pltpu.CompilerParams(
            dimension_semantics=("parallel", "arbitrary"),
            vmem_limit_bytes=_VMEM_LIMIT_BYTES,
        ),
        cost_estimate=pl.CostEstimate(
            flops=2 * B * D,
            transcendentals=0,
            bytes_accessed=itemsize * (B * D + d_pad) + 4 * B,
        ),
    )(x, w_col, b)


# ---------------------------------------------------------------------------
# Demo / self-check
# ---------------------------------------------------------------------------
if __name__ == "__main__":
    # Small shapes consistent with the module: batch=8, input_dim=32.
    batch, input_dim = 8, 32
    key = jax.random.PRNGKey(0)
    kx, kw, kb = jax.random.split(key, 3)

    # Mirror the module's __init__: integer weight in [0, 10), default Linear bias init.
    weight = jax.random.randint(kw, (1, input_dim), 0, 10).astype(jnp.float32)
    bound = 1.0 / (input_dim ** 0.5)
    bias = jax.random.uniform(kb, (1,), minval=-bound, maxval=bound, dtype=jnp.float32)
    # Half-integer-valued inputs: exact in any matmul precision, so the round()
    # comparison against the XLA reference cannot flip on FP noise.
    x = jax.random.randint(kx, (batch, input_dim), -6, 7).astype(jnp.float32) * 0.5

    out = jax.block_until_ready(integer_regression_forward(x, weight, bias))
    ref = jnp.round(x @ weight.T + bias.reshape(1, 1))
    assert out.shape == (batch, 1)
    assert bool(jnp.allclose(out, ref)), "Pallas output mismatch vs reference (fast path)"

    # Second check: forces the K-tiled path (block_k=128 < D), exercising the resident
    # weight slice, the ragged K-tail mask (D=200), and batch-tail block clamping (B=300).
    k2x, k2w, k2b = jax.random.split(jax.random.PRNGKey(1), 3)
    B2, D2 = 300, 200
    x2 = jax.random.randint(k2x, (B2, D2), -3, 4).astype(jnp.float32)
    w2 = jax.random.randint(k2w, (1, D2), 0, 10).astype(jnp.float32)
    b2 = jax.random.uniform(k2b, (1,), minval=-0.05, maxval=0.05, dtype=jnp.float32)

    out2 = jax.block_until_ready(
        integer_regression_forward(x2, w2, b2, block_b=128, block_k=128))
    ref2 = jnp.round(x2 @ w2.T + b2.reshape(1, 1))
    assert out2.shape == (B2, 1)
    assert bool(jnp.allclose(out2, ref2)), "Pallas output mismatch vs reference (K-tiled)"

    print("KERNEL_OK")
</pallas_src>

<mosaic_0001>
module attributes {stable_mosaic.version = 11 : i64} {
  func.func @_gemv_fullk_kernel(%arg0: i32, %arg1: memref<8x32xf32, #tpu.memory_space<vmem>>, %arg2: memref<32x1xf32, #tpu.memory_space<vmem>>, %arg3: memref<1xf32, #tpu.memory_space<smem>>, %arg4: memref<8x1xf32, #tpu.memory_space<vmem>>) attributes {dimension_semantics = [#tpu.dimension_semantics<parallel>], iteration_bounds = array<i64: 1>, scalar_prefetch = 0 : i64, scratch_operands = 0 : i64, tpu.core_type = #tpu.core_type<tc>, window_params = [{transform_indices = @transform_0, window_bounds = array<i64: 8, 32>}, {pipeline_mode = #tpu.pipeline_mode<synchronous>, transform_indices = @transform_1, window_bounds = array<i64: 32, 1>}, {transform_indices = @transform_2, window_bounds = array<i64: 1>}, {transform_indices = @transform_3, window_bounds = array<i64: 8, 1>}]} {
    %c0 = arith.constant 0 : index
    %c0_0 = arith.constant 0 : index
    %0 = vector.load %arg1[%c0, %c0_0] : memref<8x32xf32, #tpu.memory_space<vmem>>, vector<8x32xf32>
    %c0_1 = arith.constant 0 : index
    %c0_2 = arith.constant 0 : index
    %1 = vector.load %arg2[%c0_1, %c0_2] : memref<32x1xf32, #tpu.memory_space<vmem>>, vector<32x1xf32>
    %cst = arith.constant dense<0.000000e+00> : vector<8x1xf32>
    %2 = tpu.matmul %0, %1, %cst {dimension_numbers = #tpu.dot_dimension_numbers<[1], [0], [0], [1], [0, 0, 1, 1], [], []>} : vector<8x32xf32>, vector<32x1xf32>, vector<8x1xf32> -> vector<8x1xf32>
    %c0_3 = arith.constant 0 : index
    %3 = memref.load %arg3[%c0_3] : memref<1xf32, #tpu.memory_space<smem>>
    %4 = vector.broadcast %3 : f32 to vector<8x1xf32>
    %5 = arith.addf %2, %4 : vector<8x1xf32>
    %6 = math.roundeven %5 : vector<8x1xf32>
    %c0_4 = arith.constant 0 : index
    %c0_5 = arith.constant 0 : index
    %7 = vector.load %arg4[%c0_4, %c0_5] : memref<8x1xf32, #tpu.memory_space<vmem>>, vector<8x1xf32>
    tpu.vector_store %arg4[%c0_4, %c0_5], %6 {strides = array<i32>} : memref<8x1xf32, #tpu.memory_space<vmem>>, vector<8x1xf32>,
    return
  }
  func.func @transform_0(%arg0: i32) -> (i32, i32) {
    %c0_i32 = arith.constant 0 : i32
    %c0_i32_0 = arith.constant 0 : i32
    return %arg0, %c0_i32 : i32, i32
  }
  func.func @transform_1(%arg0: i32) -> (i32, i32) {
    %c0_i32 = arith.constant 0 : i32
    %c0_i32_0 = arith.constant 0 : i32
    %c0_i32_1 = arith.constant 0 : i32
    return %c0_i32, %c0_i32_0 : i32, i32
  }
  func.func @transform_2(%arg0: i32) -> i32 {
    %c0_i32 = arith.constant 0 : i32
    %c0_i32_0 = arith.constant 0 : i32
    return %c0_i32 : i32
  }
  func.func @transform_3(%arg0: i32) -> (i32, i32) {
    %c0_i32 = arith.constant 0 : i32
    %c0_i32_0 = arith.constant 0 : i32
    return %arg0, %c0_i32 : i32, i32
  }
}

</mosaic_0001>

<llo_original>
// kernel: integer_regression_forward.1
$region0: #{integer_regression_forward.1}
  #allocation0 [shape = 'u32[]', space=smem, size = 0x4, offset = 0x4, fixed_abs, tag = 'smem constant byte address 0x4 - core index']
  #allocation1 [shape = 'u32[144,128]{1,0:T(1,128)}', space=vmem, size = 0x12000, scoped, tag = 'internal scratch']
  #allocation2 [shape = 'f32[1]{0:T(128)S(6)}', space=smem, size = 0x200, scoped, tag = 'scoped memory for integer_regression_forward.1']
  %s0 = inlined_call_operand.vmem [shape: f32[8,32], index: 0, kind: input, shape index: {}]
  %s1 = inlined_call_operand.vmem [shape: f32[32,1], index: 1, kind: input, shape index: {}]
  %s2 = inlined_call_operand.<no memory space> [shape: f32[1], index: 2, kind: input, shape index: {}]
  %s3 = inlined_call_operand.vmem [shape: f32[8,1], index: 3, kind: output, shape index: {}]
  %s4 = sld [smem:[#allocation0]]
  $region22: #{integer_regression_forward.1} parent=0
    _
  %s6 = ssub.s32 1, %s4
  %s7 = scalar_select 0, %s6, %s4
  %8 = sst [smem:[#allocation2]] %s2
  // Predicated region
  $region2: #{integer_regression_forward.1} parent=0 // pred_check
    _
  $region3: #{integer_regression_forward.1} parent=0 // pred_check_branch
    %10 = sbr.rel (0) target = $region5
  $region4: #{integer_regression_forward.1} parent=0 // pred_region
    _
  $region5: #{integer_regression_forward.1} parent=0 // pred_fallthru
    _
  // Predicated region
  $region6: #{integer_regression_forward.1} parent=0 // pred_check
    _
  $region7: #{integer_regression_forward.1} parent=0 // pred_check_branch
    %12 = sbr.rel (0) target = $region9
  $region8: #{integer_regression_forward.1} parent=0 // pred_region
    _
  $region9: #{integer_regression_forward.1} parent=0 // pred_fallthru
    _
  // Predicated region
  $region10: #{integer_regression_forward.1} parent=0 // pred_check
    _
  $region11: #{integer_regression_forward.1} parent=0 // pred_check_branch
    %14 = sbr.rel (0) target = $region13
  $region12: #{integer_regression_forward.1} parent=0 // pred_region
    _
  $region13: #{integer_regression_forward.1} parent=0 // pred_fallthru
    _
  %v15 = vld [vmem:[%s0] sm:$0xff]
  %v16 = vld [vmem:[%s1] sm:$0xff]
  %v17 = vld [vmem:[%s1 + $0x8] sm:$0xff]
  %v18 = vld [vmem:[%s1 + $0x10] sm:$0xff]
  %v19 = vld [vmem:[%s1 + $0x18] sm:$0xff]
  %s20 = sld [smem:[#allocation2]]
  %v21 = vstv %s20
  %vm22 = vcmask 261120
  %v24 = vsel %vm22, %v15, 0
  %26 = vmatprep.subr.mxu0 0.0
  %27 = vmatpush1.msra.mxu0 0.0
  %28 = vmatprep.subr.mxu0 0.0
  %29 = vmatpush1.msra.mxu0 0.0
  %30 = vmatprep.subr.mxu0 0.0
  %31 = vmatpush1.msra.mxu0 0.0
  %32 = vmatprep.subr.mxu0 0.0
  %33 = vmatpush1.msra.mxu0 0.0
  %34 = vmatprep.subr.mxu0 0.0
  %35 = vmatpush1.msra.mxu0 0.0
  %36 = vmatprep.subr.mxu0 0.0
  %37 = vmatpush1.msra.mxu0 0.0
  %38 = vmatprep.subr.mxu0 0.0
  %39 = vmatpush1.msra.mxu0 0.0
  %40 = vmatprep.subr.mxu0 0.0
  %41 = vmatpush1.msra.mxu0 0.0
  %42 = vmatprep.subr.mxu0 0.0
  %43 = vmatpush1.msra.mxu0 0.0
  %44 = vmatprep.subr.mxu0 0.0
  %45 = vmatpush1.msra.mxu0 0.0
  %46 = vmatprep.subr.mxu0 0.0
  %47 = vmatpush1.msra.mxu0 0.0
  %48 = vmatprep.subr.mxu0 0.0
  %49 = vmatpush1.msra.mxu0 0.0
  %50 = vmatprep.subr.mxu0 0.0
  %51 = vmatpush1.msra.mxu0 %v19
  %52 = vmatprep.subr.mxu0 0.0
  %53 = vmatpush1.msra.mxu0 %v18
  %54 = vmatprep.subr.mxu0 0.0
  %55 = vmatpush1.msra.mxu0 %v17
  %56 = vmatprep.subr.mxu0 0.0
  %57 = vmatpush1.msra.mxu0 %v16
  %58 = vmatprep.subr.mxu0 0.0
  %59 = vmatpush2.msra.mxu0 0.0
  %60 = vmatprep.subr.mxu0 0.0
  %61 = vmatpush2.msra.mxu0 0.0
  %62 = vmatprep.subr.mxu0 0.0
  %63 = vmatpush2.msra.mxu0 0.0
  %64 = vmatprep.subr.mxu0 0.0
  %65 = vmatpush2.msra.mxu0 0.0
  %66 = vmatprep.subr.mxu0 0.0
  %67 = vmatpush2.msra.mxu0 0.0
  %68 = vmatprep.subr.mxu0 0.0
  %69 = vmatpush2.msra.mxu0 0.0
  %70 = vmatprep.subr.mxu0 0.0
  %71 = vmatpush2.msra.mxu0 0.0
  %72 = vmatprep.subr.mxu0 0.0
  %73 = vmatpush2.msra.mxu0 0.0
  %74 = vmatprep.subr.mxu0 0.0
  %75 = vmatpush2.msra.mxu0 0.0
  %76 = vmatprep.subr.mxu0 0.0
  %77 = vmatpush2.msra.mxu0 0.0
  %78 = vmatprep.subr.mxu0 0.0
  %79 = vmatpush2.msra.mxu0 0.0
  %80 = vmatprep.subr.mxu0 0.0
  %81 = vmatpush2.msra.mxu0 0.0
  %82 = vmatprep.subr.mxu0 0.0
  %83 = vmatpush2.msra.mxu0 0.0
  %84 = vmatprep.subr.mxu0 0.0
  %85 = vmatpush2.msra.mxu0 0.0
  %86 = vmatprep.subr.mxu0 0.0
  %87 = vmatpush2.msra.mxu0 0.0
  %88 = vmatprep.subr.mxu0 0.0
  %89 = vmatpush2.msra.mxu0 0.0
  %90 = vmatprep.mubr.f32.mxu0 0.0
  %91 = vmatmul.mubr.f32.gmra.mxu0 %v24
  %v92 = vpop.f32.mrf.mxu0
  %v93 = vadd.f32 %v21, %v92
  %v94 = vpop.f32.mrf.mxu0
  %95 = vdwg.mxu0
  %v96 = vround.ne.pseudo %v93
  %vm97 = vcmask 7168
  %98 = vst.msk [vmem:[%s3] sm:$0xff] %vm97, %v96
  // Predicated region
  $region14: #{integer_regression_forward.1} parent=0 // pred_check
    _
  $region15: #{integer_regression_forward.1} parent=0 // pred_check_branch
    %100 = sbr.rel (0) target = $region17
  $region16: #{integer_regression_forward.1} parent=0 // pred_region
    _
  $region17: #{integer_regression_forward.1} parent=0 // pred_fallthru
    _
  // Predicated region
  $region18: #{integer_regression_forward.1} parent=0 // pred_check
    _
  $region19: #{integer_regression_forward.1} parent=0 // pred_check_branch
    %102 = sbr.rel (0) target = $region21
  $region20: #{integer_regression_forward.1} parent=0 // pred_region
    _
  $region21: #{integer_regression_forward.1} parent=0 // pred_fallthru
    _

</llo_original>
